<compile_context>
chip_gen: v7x
topology: tpu7x:2x2x1
jax: 0.10.0
libtpu: 0.0.40
codegen_flags: <defaults>
</compile_context>

<pallas_src>
import functools

import jax
import jax.numpy as jnp
from jax import lax
from jax.experimental import pallas as pl
from jax.experimental.pallas import tpu as pltpu


def _latent_encoder_kernel(z_ref, w1_ref, w2_ref, b_ref, out_ref,
                           *, batch, num_context, latent_dim):
    # ---- Linear(input_dim, latent_dim) + ReLU over all batch*context rows ----
    # bf16 operands, f32 MXU accumulation; bias add + ReLU in f32.
    h1 = jnp.dot(z_ref[...], w1_ref[...],
                 preferred_element_type=jnp.float32)              # (B*N, L) f32
    h1 = jnp.maximum(h1 + b_ref[0:1, :latent_dim], 0.0)

    # ---- Mean pooling over num_context, BEFORE the second Linear ----
    # Exact in real arithmetic: mean(h1 @ w2 + b2) == mean(h1) @ w2 + b2.
    # Sublane-split reshape + cross-sublane sum (XLU); relies on the row-major
    # (B, N, D) -> (B*N, D) fold done in the wrapper.  Scale stays in f32.
    h1g = h1.reshape(batch, num_context, latent_dim)
    pooled = jnp.sum(h1g, axis=1) * (1.0 / num_context)           # (B, L) f32

    # ---- Linear(latent_dim, 2*latent_dim) on the pooled representation ----
    # w2 is lane-padded wrapper-side to the (lane-dense) output width P.
    h2 = jnp.dot(pooled.astype(w2_ref.dtype), w2_ref[...],
                 preferred_element_type=jnp.float32) + b_ref[1:2, :]   # (B, P)

    # ---- mean / sigma heads kept as one lane-dense (B, P) slab ----
    lane = lax.broadcasted_iota(jnp.int32, h2.shape, 1)
    sig = 0.1 + 0.9 * jax.nn.sigmoid(h2)
    out_ref[...] = jnp.where(lane >= latent_dim, sig, h2).astype(out_ref.dtype)


def latent_encoder_forward(z_deter, w1, b1, w2, b2):
    """Pallas forward pass of LatentEncoder.

    Args:
        z_deter: (batch, num_context, input_dim) float32
        w1: (input_dim, latent_dim), b1: (latent_dim,) or (1, latent_dim)
        w2: (latent_dim, 2*latent_dim), b2: (2*latent_dim,) or (1, 2*latent_dim)

    Returns:
        mean:  (batch, 1, latent_dim) float32
        sigma: (batch, 1, latent_dim) float32
    """
    assert z_deter.ndim == 3, "Incorrect shapes: ensure the context is a rank-3 tensor."
    B, N, D = z_deter.shape
    L = w1.shape[1]
    assert w2.shape == (L, 2 * L)

    # Normalize biases (handles 1-D nn.Linear-style biases too) — exact f32.
    b1 = jnp.reshape(b1, (1, L)).astype(jnp.float32)
    b2 = jnp.reshape(b2, (1, 2 * L)).astype(jnp.float32)

    # Lane-dense output width (>= 128, multiple of 128).
    P = max(128, ((2 * L + 127) // 128) * 128)

    # Wrapper-side (XLA) prep: fold batch into the matmul M dimension, cast
    # matmul operands to bf16, lane-pad w2, and pack both biases (kept f32)
    # into a single operand to cut the number of per-call input DMAs.
    z2d = z_deter.reshape(B * N, D).astype(jnp.bfloat16)
    w1_bf = w1.astype(jnp.bfloat16)
    w2_pad = jnp.zeros((L, P), jnp.bfloat16).at[:, :2 * L].set(w2.astype(jnp.bfloat16))
    b_pack = jnp.zeros((2, P), jnp.float32)
    b_pack = b_pack.at[0, :L].set(b1[0])
    b_pack = b_pack.at[1, :2 * L].set(b2[0])

    kernel = functools.partial(
        _latent_encoder_kernel, batch=B, num_context=N, latent_dim=L)

    # Single gridless invocation; all operands are tiny and fully VMEM-resident,
    # so no blocking / double-buffering machinery is paid for.
    vmem = lambda: pl.BlockSpec(memory_space=pltpu.MemorySpace.VMEM)
    out = pl.pallas_call(
        kernel,
        out_shape=jax.ShapeDtypeStruct((B, P), jnp.float32),
        in_specs=[vmem(), vmem(), vmem(), vmem()],
        out_specs=vmem(),
    )(z2d, w1_bf, w2_pad, b_pack)                                  # (B, P)

    mean = out[:, None, :L]
    sigma = out[:, None, L:2 * L]
    return mean, sigma


def latent_encoder_reference(z_deter, w1, b1, w2, b2):
    """Plain-JAX f32 reference mirroring the PyTorch forward."""
    L = w1.shape[1]
    b1 = jnp.reshape(b1, (1, -1))
    b2 = jnp.reshape(b2, (1, -1))
    h = jnp.maximum(z_deter @ w1 + b1, 0.0)
    h = h @ w2 + b2
    h = jnp.mean(h, axis=1, keepdims=True)
    mean = h[..., :L]
    sigma = 0.1 + 0.9 * jax.nn.sigmoid(h[..., L:])
    return mean, sigma


if __name__ == "__main__":
    # Small shapes consistent with the module's forward contract.
    batch, num_context, input_dim, latent_dim = 2, 8, 32, 32

    key = jax.random.PRNGKey(0)
    k_z, k_w1, k_b1, k_w2, k_b2 = jax.random.split(key, 5)

    z_deter = jax.random.normal(
        k_z, (batch, num_context, input_dim), dtype=jnp.float32)

    # Deterministic synthetic parameters (shapes from nn.Linear layers in __init__).
    w1 = jax.random.normal(k_w1, (input_dim, latent_dim), dtype=jnp.float32) * 0.1
    b1 = jax.random.normal(k_b1, (1, latent_dim), dtype=jnp.float32) * 0.01
    w2 = jax.random.normal(k_w2, (latent_dim, 2 * latent_dim), dtype=jnp.float32) * 0.1
    b2 = jax.random.normal(k_b2, (1, 2 * latent_dim), dtype=jnp.float32) * 0.01

    mean, sigma = latent_encoder_forward(z_deter, w1, b1, w2, b2)
    jax.block_until_ready((mean, sigma))

    ref_mean, ref_sigma = latent_encoder_reference(z_deter, w1, b1, w2, b2)
    assert mean.shape == (batch, 1, latent_dim)
    assert sigma.shape == (batch, 1, latent_dim)
    # Kernel uses bf16 MXU operands (f32 accumulation / biases / activations),
    # so compare against the f32 reference at bf16-level tolerance.
    assert jnp.allclose(mean, ref_mean, atol=2e-2, rtol=2e-2)
    assert jnp.allclose(sigma, ref_sigma, atol=2e-2, rtol=2e-2)

    print("KERNEL_OK")
</pallas_src>

<mosaic_0001>
module attributes {stable_mosaic.version = 11 : i64} {
  func.func @_latent_encoder_kernel(%arg0: memref<16x32xbf16, #tpu.memory_space<vmem>>, %arg1: memref<32x32xbf16, #tpu.memory_space<vmem>>, %arg2: memref<32x128xbf16, #tpu.memory_space<vmem>>, %arg3: memref<2x128xf32, #tpu.memory_space<vmem>>, %arg4: memref<2x128xf32, #tpu.memory_space<vmem>>) attributes {dimension_semantics = [], scalar_prefetch = 0 : i64, scratch_operands = 0 : i64, tpu.core_type = #tpu.core_type<tc>} {
    %c0 = arith.constant 0 : index
    %c0_0 = arith.constant 0 : index
    %0 = vector.load %arg0[%c0, %c0_0] : memref<16x32xbf16, #tpu.memory_space<vmem>>, vector<16x32xbf16>
    %c0_1 = arith.constant 0 : index
    %c0_2 = arith.constant 0 : index
    %1 = vector.load %arg1[%c0_1, %c0_2] : memref<32x32xbf16, #tpu.memory_space<vmem>>, vector<32x32xbf16>
    %cst = arith.constant dense<0.000000e+00> : vector<16x32xf32>
    %2 = tpu.matmul %0, %1, %cst {dimension_numbers = #tpu.dot_dimension_numbers<[1], [0], [0], [1], [0, 0, 1, 1], [], []>} : vector<16x32xbf16>, vector<32x32xbf16>, vector<16x32xf32> -> vector<16x32xf32>
    %c0_3 = arith.constant 0 : index
    %c0_4 = arith.constant 0 : index
    %3 = vector.load %arg3[%c0_3, %c0_4] : memref<2x128xf32, #tpu.memory_space<vmem>>, vector<1x32xf32>
    %4 = vector.broadcast %3 : vector<1x32xf32> to vector<16x32xf32>
    %5 = arith.addf %2, %4 : vector<16x32xf32>
    %cst_5 = arith.constant 0.000000e+00 : f32
    %6 = vector.broadcast %cst_5 : f32 to vector<16x32xf32>
    %7 = arith.maximumf %5, %6 : vector<16x32xf32>
    %8 = vector.shape_cast %7 : vector<16x32xf32> to vector<2x8x32xf32>
    %cst_6 = arith.constant dense<0.000000e+00> : vector<2x32xf32>
    %9 = vector.multi_reduction <add>, %8, %cst_6 [1] : vector<2x8x32xf32> to vector<2x32xf32>
    %cst_7 = arith.constant 1.250000e-01 : f32
    %10 = vector.broadcast %cst_7 : f32 to vector<2x32xf32>
    %11 = arith.mulf %9, %10 : vector<2x32xf32>
    %12 = arith.truncf %11 : vector<2x32xf32> to vector<2x32xbf16>
    %c0_8 = arith.constant 0 : index
    %c0_9 = arith.constant 0 : index
    %13 = vector.load %arg2[%c0_8, %c0_9] : memref<32x128xbf16, #tpu.memory_space<vmem>>, vector<32x128xbf16>
    %cst_10 = arith.constant dense<0.000000e+00> : vector<2x128xf32>
    %14 = tpu.matmul %12, %13, %cst_10 {dimension_numbers = #tpu.dot_dimension_numbers<[1], [0], [0], [1], [0, 0, 1, 1], [], []>} : vector<2x32xbf16>, vector<32x128xbf16>, vector<2x128xf32> -> vector<2x128xf32>
    %c1 = arith.constant 1 : index
    %c0_11 = arith.constant 0 : index
    %15 = vector.load %arg3[%c1, %c0_11] : memref<2x128xf32, #tpu.memory_space<vmem>>, vector<1x128xf32>
    %16 = vector.broadcast %15 : vector<1x128xf32> to vector<2x128xf32>
    %17 = arith.addf %14, %16 : vector<2x128xf32>
    %18 = tpu.iota {dimensions = array<i32: 1>} : vector<2x128xi32>
    %19 = arith.negf %17 : vector<2x128xf32>
    %20 = math.exp %19 : vector<2x128xf32>
    %cst_12 = arith.constant 1.000000e+00 : f32
    %21 = vector.broadcast %cst_12 : f32 to vector<2x128xf32>
    %22 = arith.addf %21, %20 : vector<2x128xf32>
    %23 = arith.divf %21, %22 : vector<2x128xf32>
    %cst_13 = arith.constant 0.899999976 : f32
    %24 = vector.broadcast %cst_13 : f32 to vector<2x128xf32>
    %25 = arith.mulf %24, %23 : vector<2x128xf32>
    %cst_14 = arith.constant 1.000000e-01 : f32
    %26 = vector.broadcast %cst_14 : f32 to vector<2x128xf32>
    %27 = arith.addf %26, %25 : vector<2x128xf32>
    %c32_i32 = arith.constant 32 : i32
    %28 = vector.broadcast %c32_i32 : i32 to vector<2x128xi32>
    %29 = arith.cmpi sge, %18, %28 : vector<2x128xi32>
    %30 = arith.select %29, %27, %17 : vector<2x128xi1>, vector<2x128xf32>
    %c0_15 = arith.constant 0 : index
    %c0_16 = arith.constant 0 : index
    %31 = vector.load %arg4[%c0_15, %c0_16] : memref<2x128xf32, #tpu.memory_space<vmem>>, vector<2x128xf32>
    tpu.vector_store %arg4[%c0_15, %c0_16], %30 {strides = array<i32>} : memref<2x128xf32, #tpu.memory_space<vmem>>, vector<2x128xf32>,
    return
  }
}

</mosaic_0001>

<llo_original>
// kernel: tpu_custom_call.1
$region0: #{tpu_custom_call.1}
  #allocation0 [shape = 'u32[]', space=smem, size = 0x4, offset = 0x4, fixed_abs, tag = 'smem constant byte address 0x4 - core index']
  #allocation1 [shape = 'u32[144,128]{1,0:T(1,128)}', space=vmem, size = 0x12000, scoped, tag = 'internal scratch']
  %s0 = inlined_call_operand.hbm [shape: bf16[16,32], index: 0, kind: input, shape index: {}]
  %s1 = inlined_call_operand.hbm [shape: bf16[32,32], index: 1, kind: input, shape index: {}]
  %s2 = inlined_call_operand.hbm [shape: bf16[32,128], index: 2, kind: input, shape index: {}]
  %s3 = inlined_call_operand.vmem [shape: f32[2,128], index: 3, kind: input, shape index: {}]
  %s4 = inlined_call_operand.hbm [shape: f32[2,128], index: 4, kind: output, shape index: {}]
  %s5 = sld [smem:[#allocation0]]
  $region38: #{tpu_custom_call.1} parent=0
    _
  %s7 = ssub.s32 1, %s5
  %s8 = scalar_select 0, %s7, %s5
  $region1: #{tpu_custom_call.1} parent=0
    #allocation2 [shape = 'u8[4096]{0}', space=vmem, size = 0x1000, scoped, tag = 'input window, operand 0, single buffered']
    #allocation3 [shape = 's32[1]{0}', space=sflag, size = 0x4, scoped, tag = 'scoped memory for tpu_custom_call.1']
    #allocation4 [shape = 's32[1]{0}', space=sflag, size = 0x4, scoped, tag = 'scoped memory for tpu_custom_call.1']
    #allocation5 [shape = 'u8[8192]{0}', space=vmem, size = 0x2000, scoped, tag = 'input window, operand 1, single buffered']
    #allocation6 [shape = 's32[1]{0}', space=sflag, size = 0x4, scoped, tag = 'scoped memory for tpu_custom_call.1']
    #allocation7 [shape = 'u8[8192]{0}', space=vmem, size = 0x2000, scoped, tag = 'input window, operand 2, single buffered']
    #allocation8 [shape = 'u8[1024]{0}', space=vmem, size = 0x400, scoped, tag = 'output window, operand 0, single buffered']
    %9 = vsyncpa [#allocation3], 0
    %10 = vsyncpa [#allocation6], 0
    %11 = vsyncpa [#allocation4], 0
    // Predicated region
    $region2: #{tpu_custom_call.1} parent=1 // pred_check
      _
    $region3: #{tpu_custom_call.1} parent=1 // pred_check_branch
      %13 = sbr.rel (0) target = $region5
    $region4: #{tpu_custom_call.1} parent=1 // pred_region
      %s15 = ssub.s32 128, 128
      %16 = vsyncadd [#allocation3], %s15
      %s17 = sshll.u32 [#allocation2], 4
      %s18 = int_to_ptr.vmem [resolvable:$true] %s17
      %23 = dma.hbm_to_vmem [thread:$0]  %s0, 128, %s18, [#allocation3], 64, 64, 4
    $region5: #{tpu_custom_call.1} parent=1 // pred_fallthru
      _
    // Predicated region
    $region6: #{tpu_custom_call.1} parent=1 // pred_check
      _
    $region7: #{tpu_custom_call.1} parent=1 // pred_check_branch
      %25 = sbr.rel (0) target = $region9
    $region8: #{tpu_custom_call.1} parent=1 // pred_region
      %s27 = ssub.s32 256, 256
      %28 = vsyncadd [#allocation6], %s27
      %s29 = sshll.u32 [#allocation5], 4
      %s30 = int_to_ptr.vmem [resolvable:$true] %s29
      %35 = dma.hbm_to_vmem [thread:$0]  %s1, 256, %s30, [#allocation6], 64, 64, 4
    $region9: #{tpu_custom_call.1} parent=1 // pred_fallthru
      _
    // Predicated region
    $region10: #{tpu_custom_call.1} parent=1 // pred_check
      _
    $region11: #{tpu_custom_call.1} parent=1 // pred_check_branch
      %37 = sbr.rel (0) target = $region13
    $region12: #{tpu_custom_call.1} parent=1 // pred_region
      %s39 = ssub.s32 256, 256
      %40 = vsyncadd [#allocation6], %s39
      %s41 = sshll.u32 [#allocation7], 4
      %s42 = int_to_ptr.vmem [resolvable:$true] %s41
      %47 = dma.hbm_to_vmem [thread:$0]  %s2, 256, %s42, [#allocation6], 64, 64, 4
    $region13: #{tpu_custom_call.1} parent=1 // pred_fallthru
      _
    // Predicated region
    $region14: #{tpu_custom_call.1} parent=1 // pred_check
      _
    $region15: #{tpu_custom_call.1} parent=1 // pred_check_branch
      %49 = sbr.rel (0) target = $region17
    $region16: #{tpu_custom_call.1} parent=1 // pred_region
      _
    $region17: #{tpu_custom_call.1} parent=1 // pred_fallthru
      _
    // Predicated region
    $region18: #{tpu_custom_call.1} parent=1 // pred_check
      _
    $region19: #{tpu_custom_call.1} parent=1 // pred_check_branch
      %51 = sbr.rel (0) target = $region21
    $region20: #{tpu_custom_call.1} parent=1 // pred_region
      %52 = dma.done [#allocation3], 128
    $region21: #{tpu_custom_call.1} parent=1 // pred_fallthru
      _
    // Predicated region
    $region22: #{tpu_custom_call.1} parent=1 // pred_check
      _
    $region23: #{tpu_custom_call.1} parent=1 // pred_check_branch
      %54 = sbr.rel (0) target = $region25
    $region24: #{tpu_custom_call.1} parent=1 // pred_region
      %55 = dma.done [#allocation6], 256
    $region25: #{tpu_custom_call.1} parent=1 // pred_fallthru
      _
    // Predicated region
    $region26: #{tpu_custom_call.1} parent=1 // pred_check
      _
    $region27: #{tpu_custom_call.1} parent=1 // pred_check_branch
      %57 = sbr.rel (0) target = $region29
    $region28: #{tpu_custom_call.1} parent=1 // pred_region
      %58 = dma.done [#allocation6], 256
    $region29: #{tpu_custom_call.1} parent=1 // pred_fallthru
      _
    %v60 = vld [vmem:[#allocation2] sm:$0xf]
    %v61 = vld [vmem:[#allocation2 + $0x4] sm:$0xf]
    %v62 = vld [vmem:[#allocation5] sm:$0xf]
    %v63 = vld [vmem:[#allocation5 + $0x4] sm:$0xf]
    %v64 = vld [vmem:[#allocation5 + $0x8] sm:$0xf]
    %v65 = vld [vmem:[#allocation5 + $0xc] sm:$0xf]
    %v66 = vld [vmem:[%s3] sm:$0x1]
    %v67 = vlaneseq
    %v68 = vshrl.u32 %v67, 7
    %v69 = vsub.s32 0, %v68
    %v70 = vrot.slane %v66, %v69
    %v73 = vunpack.c.l.b16 %v60
    %v74 = vunpack.c.l.b16 %v61
    %v75 = vpack.c.b16 %v74, %v73
    %v80 = vunpack.c.l.b16 %v62
    %v81 = vunpack.c.l.b16 %v63
    %v82 = vunpack.c.l.b16 %v64
    %v83 = vunpack.c.l.b16 %v65
    %v84 = vpack.c.b16 %v81, %v80
    %v85 = vpack.c.b16 %v83, %v82
    %vm88 = vcmask 261120
    %v90 = vsel %vm88, %v75, 0
    %92 = vmatprep.subr.bf16.mxu0 0
    %93 = vmatpush1.bf16.msra.mxu0 %v84
    %94 = vmatprep.subr.bf16.mxu0 0
    %95 = vmatpush1.bf16.msra.mxu0 %v85
    %96 = vmatprep.subr.bf16.mxu0 0
    %97 = vmatpush1.bf16.msra.mxu0 0
    %98 = vmatprep.subr.bf16.mxu0 0
    %99 = vmatpush1.bf16.msra.mxu0 0
    %100 = vmatprep.subr.bf16.mxu0 0
    %101 = vmatpush1.bf16.msra.mxu0 0
    %102 = vmatprep.subr.bf16.mxu0 0
    %103 = vmatpush1.bf16.msra.mxu0 0
    %104 = vmatprep.subr.bf16.mxu0 0
    %105 = vmatpush1.bf16.msra.mxu0 0
    %106 = vmatprep.subr.bf16.mxu0 0
    %107 = vmatpush1.bf16.msra.mxu0 0
    %108 = vmatprep.subr.bf16.mxu0 0
    %109 = vmatpush1.bf16.msra.mxu0 0
    %110 = vmatprep.subr.bf16.mxu0 0
    %111 = vmatpush1.bf16.msra.mxu0 0
    %112 = vmatprep.subr.bf16.mxu0 0
    %113 = vmatpush1.bf16.msra.mxu0 0
    %114 = vmatprep.subr.bf16.mxu0 0
    %115 = vmatpush1.bf16.msra.mxu0 0
    %116 = vmatprep.subr.bf16.mxu0 0
    %117 = vmatpush1.bf16.msra.mxu0 0
    %118 = vmatprep.subr.bf16.mxu0 0
    %119 = vmatpush1.bf16.msra.mxu0 0
    %120 = vmatprep.subr.bf16.mxu0 0
    %121 = vmatpush1.bf16.msra.mxu0 0
    %122 = vmatprep.subr.bf16.mxu0 0
    %123 = vmatpush1.bf16.msra.mxu0 0
    %124 = vmatprep.mubr.bf16.mxu0 0
    %125 = vmatmul.mubr.bf16.gmra.mrb[0].mxu0 %v90
    %v126 = vpop.f32.mrb[0].mxu0
    %v127 = vadd.f32 %v70, %v126
    %v128 = vpop.f32.mrb[0].mxu0
    %v129 = vpop.f32.mrb[0].mxu0
    %v130 = vadd.f32 %v70, %v129
    %v131 = vpop.f32.mrb[0].mxu0
    %132 = vdwg.mxu0
    %v133 = vmax.f32 %v127, 0.0
    %v134 = vmax.f32 %v130, 0.0
    %v135 = vsel %vm88, %v133, 0.0
    %v136 = vrot.slane %v135, 4
    %v137 = vadd.f32 %v135, %v136
    %v138 = vrot.slane %v137, 2
    %v139 = vadd.f32 %v137, %v138
    %v140 = vrot.slane %v139, 1
    %v141 = vadd.f32 %v139, %v140
    %v142 = vsel %vm88, %v134, 0.0
    %v143 = vrot.slane %v142, 4
    %v144 = vadd.f32 %v142, %v143
    %v145 = vrot.slane %v144, 2
    %v146 = vadd.f32 %v144, %v145
    %v147 = vrot.slane %v146, 1
    %v148 = vadd.f32 %v146, %v147
    %v149 = vmul.f32 %v141, 0.125
    %v150 = vmul.f32 %v148, 0.125
    %v151 = vpack.c.bf16 %v149, %v149
    %v152 = vpack.c.bf16 %v150, %v150
    %v153 = vld [vmem:[#allocation7] sm:$0xf]
    %v154 = vld [vmem:[#allocation7 + $0x4] sm:$0xf]
    %v155 = vld [vmem:[#allocation7 + $0x8] sm:$0xf]
    %v156 = vld [vmem:[#allocation7 + $0xc] sm:$0xf]
    %v157 = vld [vmem:[%s3 + $0x1] sm:$0x1]
    %v158 = vlaneseq
    %v159 = vshrl.u32 %v158, 7
    %v160 = vsub.s32 0, %v159
    %v161 = vrot.slane %v157, %v160
    %v164 = vunpack.c.l.b16 %v151
    %v165 = vunpack.c.l.b16 %v152
    %vm166 = vcmask 1041409
    %v167 = vsel %vm166, %v165, %v164
    %v168 = vpack.c.b16 %v167, %v167
    %v173 = vunpack.c.l.b16 %v153
    %v174 = vunpack.c.l.b16 %v154
    %v175 = vunpack.c.l.b16 %v155
    %v176 = vunpack.c.l.b16 %v156
    %v177 = vpack.c.b16 %v174, %v173
    %v178 = vpack.c.b16 %v176, %v175
    %v182 = vsel %vm88, %v168, 0
    %184 = vmatprep.subr.bf16.mxu0 0
    %185 = vmatpush1.bf16.msra.mxu0 %v177
    %186 = vmatprep.subr.bf16.mxu0 0
    %187 = vmatpush1.bf16.msra.mxu0 %v178
    %188 = vmatprep.subr.bf16.mxu0 0
    %189 = vmatpush1.bf16.msra.mxu0 0
    %190 = vmatprep.subr.bf16.mxu0 0
    %191 = vmatpush1.bf16.msra.mxu0 0
    %192 = vmatprep.subr.bf16.mxu0 0
    %193 = vmatpush1.bf16.msra.mxu0 0
    %194 = vmatprep.subr.bf16.mxu0 0
    %195 = vmatpush1.bf16.msra.mxu0 0
    %196 = vmatprep.subr.bf16.mxu0 0
    %197 = vmatpush1.bf16.msra.mxu0 0
    %198 = vmatprep.subr.bf16.mxu0 0
    %199 = vmatpush1.bf16.msra.mxu0 0
    %200 = vmatprep.subr.bf16.mxu0 0
    %201 = vmatpush1.bf16.msra.mxu0 0
    %202 = vmatprep.subr.bf16.mxu0 0
    %203 = vmatpush1.bf16.msra.mxu0 0
    %204 = vmatprep.subr.bf16.mxu0 0
    %205 = vmatpush1.bf16.msra.mxu0 0
    %206 = vmatprep.subr.bf16.mxu0 0
    %207 = vmatpush1.bf16.msra.mxu0 0
    %208 = vmatprep.subr.bf16.mxu0 0
    %209 = vmatpush1.bf16.msra.mxu0 0
    %210 = vmatprep.subr.bf16.mxu0 0
    %211 = vmatpush1.bf16.msra.mxu0 0
    %212 = vmatprep.subr.bf16.mxu0 0
    %213 = vmatpush1.bf16.msra.mxu0 0
    %214 = vmatprep.subr.bf16.mxu0 0
    %215 = vmatpush1.bf16.msra.mxu0 0
    %216 = vmatprep.mubr.bf16.mxu0 0
    %217 = vmatmul.mubr.bf16.gmra.mrb[0].mxu0 %v182
    %v218 = vpop.f32.mrb[0].mxu0
    %v219 = vadd.f32 %v161, %v218
    %v220 = vpop.f32.mrb[0].mxu0
    %v221 = vpop.f32.mrb[0].mxu0
    %v222 = vpop.f32.mrb[0].mxu0
    %223 = vdwg.mxu0
    %v224 = vlaneseq
    %v225 = vand.u32 %v224, 127
    %v226 = vxor.u32 %v219, 2147483648
    %v227 = vmul.f32 %v226, 1.442695
    %v228 = vpow.pop %v227
    %v229 = vadd.f32 %v228, 1.0
    %v230 = vrcp.pop %v229
    %v231 = vmul.f32 1.0, %v230
    %v232 = vmul.f32 %v231, 0.9
    %v233 = vadd.f32 %v232, 0.1
    %vm234 = vcmp.ge.s32.totalorder %v225, 32
    %v235 = vsel %vm234, %v233, %v219
    %236 = vst [vmem:[#allocation8] sm:$0x3] %v235
    // Predicated region
    $region30: #{tpu_custom_call.1} parent=1 // pred_check
      _
    $region31: #{tpu_custom_call.1} parent=1 // pred_check_branch
      %238 = sbr.rel (0) target = $region33
    $region32: #{tpu_custom_call.1} parent=1 // pred_region
      %s240 = ssub.s32 32, 32
      %241 = vsyncadd [#allocation4], %s240
      %s243 = sshll.u32 [#allocation8], 4
      %s244 = int_to_ptr.vmem [resolvable:$true] %s243
      %246 = dma.vmem_to_hbm [thread:$0]  %s244, 32, %s4, [#allocation4]
    $region33: #{tpu_custom_call.1} parent=1 // pred_fallthru
      _
    // Predicated region
    $region34: #{tpu_custom_call.1} parent=1 // pred_check
      _
    $region35: #{tpu_custom_call.1} parent=1 // pred_check_branch
      %248 = sbr.rel (0) target = $region37
    $region36: #{tpu_custom_call.1} parent=1 // pred_region
      %249 = dma.done [#allocation4], 32
    $region37: #{tpu_custom_call.1} parent=1 // pred_fallthru
      _
    %250 = vsyncpa [#allocation3], 1
    %251 = vsyncpa [#allocation6], 1
    %252 = vsyncpa [#allocation4], 1

</llo_original>
